<compile_context>
chip_gen: v7x
topology: tpu7x:2x2x1
jax: 0.10.0
libtpu: 0.0.40
codegen_flags: <defaults>
</compile_context>

<pallas_src>
import jax
import jax.numpy as jnp
from jax.experimental import pallas as pl
from jax.experimental.pallas import tpu as pltpu

# Padded, lane-friendly dimensions.
IN_PAD = 8            # input_dim  5  -> 8   (sublane-aligned contraction dim)
HID_PAD = 128         # hidden     64 -> 128 (full-lane vregs for h1/h2)
OUT_SUB = 8           # output     3  -> 8   (sublane rows of the transposed output tile)
DEFAULT_TILE_B = 512  # batch tile (multiple of 128); sweepable 256/512/1024
SMALL_BATCH_CUTOFF = 512  # below this, plain XLA fusion beats pallas_call launch/DMA cost


def _mlp_kernel(x_ref, w_ref, b12_ref, b3_ref, o_ref):
    # x_ref  : (TILE_B, IN_PAD)   f32   -- batch tile, cast to bf16 in-kernel
    # w_ref  : (144, HID_PAD)     bf16  -- rows = [w1 (8) ; w2 (128) ; w3^T (8)]
    # b12_ref: (2, HID_PAD)       f32   -- rows = [b1 ; b2]
    # b3_ref : (OUT_SUB, 1)       f32   -- b3 as a zero-padded column
    # o_ref  : (OUT_SUB, TILE_B)  f32   -- transposed output tile (lane-dense stores)
    xb = x_ref[...].astype(jnp.bfloat16)                        # VPU cast, no host pass

    w1 = w_ref[0:IN_PAD, :]                                     # (8, 128)
    h1 = jnp.dot(xb, w1, preferred_element_type=jnp.float32) + b12_ref[0:1, :]
    h1 = jnp.maximum(h1, 0.0).astype(jnp.bfloat16)              # (TILE_B, 128)

    w2 = w_ref[IN_PAD:IN_PAD + HID_PAD, :]                      # (128, 128)
    h2 = jnp.dot(h1, w2, preferred_element_type=jnp.float32) + b12_ref[1:2, :]
    h2 = jnp.maximum(h2, 0.0).astype(jnp.bfloat16)              # (TILE_B, 128)

    w3t = w_ref[IN_PAD + HID_PAD:IN_PAD + HID_PAD + OUT_SUB, :]  # (8, 128) torch layout (out,in)
    # out^T = W3 @ h2^T : contract the K=128 dim of both operands -> (OUT_SUB, TILE_B).
    out_t = jax.lax.dot_general(w3t, h2, (((1,), (1,)), ((), ())),
                                preferred_element_type=jnp.float32)
    o_ref[...] = out_t + b3_ref[...]                            # (8,1) broadcasts over lanes


def _round_up(n, m):
    return ((n + m - 1) // m) * m


def _pad2(a, rows, cols):
    r, c = a.shape
    return jnp.pad(a, ((0, rows - r), (0, cols - c)))


def _pack_params(params):
    """Zero-pad to lane-dense shapes and pack into 3 arrays (fewer DMA streams).
    Weights -> bf16 (MXU inputs), biases stay f32 (VPU add)."""
    w1, b1, w2, b2, w3, b3 = params
    w1p = _pad2(w1, IN_PAD, HID_PAD).astype(jnp.bfloat16)       # (8, 128)
    w2p = _pad2(w2, HID_PAD, HID_PAD).astype(jnp.bfloat16)      # (128, 128)
    w3tp = _pad2(w3.T, OUT_SUB, HID_PAD).astype(jnp.bfloat16)   # (8, 128)  torch layout (out,in)
    w_cat = jnp.concatenate([w1p, w2p, w3tp], axis=0)           # (144, 128) bf16
    b12 = jnp.concatenate([_pad2(b1, 1, HID_PAD),
                           _pad2(b2, 1, HID_PAD)], axis=0)      # (2, 128) f32
    b3c = _pad2(jnp.reshape(b3, (-1, 1)), OUT_SUB, 1)           # (8, 1) f32
    return w_cat, b12, b3c


def prompt_adjustment_forward_pallas(x, params, *, tile_b=None):
    """x: (B, input_dim) f32; params = (w1,b1,w2,b2,w3,b3) with weights in (in, out) layout
    and biases (1, out). Returns (B, output_dim) f32. Always uses the Pallas kernel."""
    B, in_dim = x.shape
    out_dim = params[4].shape[1]

    if tile_b is None:
        tile_b = min(DEFAULT_TILE_B, _round_up(B, 128))
    tile_b = max(128, _round_up(tile_b, 128))
    B_pad = _round_up(B, tile_b)

    # Zero-pad batch to a tile multiple and feature dim 5 -> 8; stays f32 (the bf16 cast
    # happens inside the kernel, removing a separate host-side cast pass).
    x_pad = x
    if B_pad != B or in_dim != IN_PAD:
        x_pad = jnp.pad(x, ((0, B_pad - B), (0, IN_PAD - in_dim)))

    w_cat, b12, b3c = _pack_params(params)

    grid = (B_pad // tile_b,)
    w_rows = IN_PAD + HID_PAD + OUT_SUB

    flops = 2 * B_pad * (IN_PAD * HID_PAD + HID_PAD * HID_PAD + HID_PAD * OUT_SUB)
    bytes_accessed = (x_pad.size * 4 + OUT_SUB * B_pad * 4
                      + w_cat.size * 2 + b12.size * 4 + b3c.size * 4)

    out_t = pl.pallas_call(
        _mlp_kernel,
        out_shape=jax.ShapeDtypeStruct((OUT_SUB, B_pad), jnp.float32),
        grid=grid,
        in_specs=[
            pl.BlockSpec((tile_b, IN_PAD), lambda i: (i, 0)),    # x: streamed over batch
            pl.BlockSpec((w_rows, HID_PAD), lambda i: (0, 0)),   # packed weights (VMEM-resident)
            pl.BlockSpec((2, HID_PAD), lambda i: (0, 0)),        # b1 ; b2
            pl.BlockSpec((OUT_SUB, 1), lambda i: (0, 0)),        # b3 column
        ],
        out_specs=pl.BlockSpec((OUT_SUB, tile_b), lambda i: (0, i)),
        compiler_params=pltpu.CompilerParams(
            dimension_semantics=("parallel",),   # shard batch tiles across TCs (v7x)
            vmem_limit_bytes=32 * 1024 * 1024,   # far above actual usage (<3 MiB); no tuning needed
        ),
        cost_estimate=pl.CostEstimate(
            flops=flops, transcendentals=0, bytes_accessed=bytes_accessed
        ),
    )(x_pad, w_cat, b12, b3c)

    # Kernel emits the transposed result: slice the valid (out_dim, B) corner and transpose.
    return out_t[:out_dim, :B].T


def _forward_xla(x, params):
    w1, b1, w2, b2, w3, b3 = params
    h = jnp.maximum(x @ w1 + b1, 0.0)
    h = jnp.maximum(h @ w2 + b2, 0.0)
    return h @ w3 + b3


def prompt_adjustment_forward(x, params):
    """Dispatcher: tiny batches go to the XLA-fused path (custom-call overhead dominates
    ~13 KFLOP/row of work); large batches use the Pallas kernel."""
    if x.shape[0] < SMALL_BATCH_CUTOFF:
        return _forward_xla(x, params)
    return prompt_adjustment_forward_pallas(x, params)


def init_params(key, input_dim, hidden_dim, output_dim):
    """Deterministic init mimicking nn.Linear's uniform(-1/sqrt(fan_in), 1/sqrt(fan_in))."""
    ks = jax.random.split(key, 6)

    def linear(kw, kb, fan_in, fan_out):
        bound = 1.0 / jnp.sqrt(float(fan_in))
        # weight stored as (in, out) == torch weight (out, in) transposed
        w = jax.random.uniform(kw, (fan_in, fan_out), jnp.float32, -bound, bound)
        b = jax.random.uniform(kb, (1, fan_out), jnp.float32, -bound, bound)
        return w, b

    w1, b1 = linear(ks[0], ks[1], input_dim, hidden_dim)
    w2, b2 = linear(ks[2], ks[3], hidden_dim, hidden_dim)
    w3, b3 = linear(ks[4], ks[5], hidden_dim, output_dim)
    return w1, b1, w2, b2, w3, b3


if __name__ == "__main__":
    input_dim, hidden_dim, output_dim = 5, 64, 3
    batch = 100  # num_documents in the original spec

    key = jax.random.PRNGKey(0)
    k_x, k_p = jax.random.split(key)

    x = jax.random.uniform(k_x, (batch, input_dim), jnp.float32)  # like torch.rand
    params = init_params(k_p, input_dim, hidden_dim, output_dim)

    # Exercise the Pallas kernel directly (the dispatcher would route B=100 to the
    # XLA-fused path because of the raised SMALL_BATCH_CUTOFF).
    fwd = jax.jit(prompt_adjustment_forward_pallas)
    out = jax.block_until_ready(fwd(x, params))
    assert out.shape == (batch, output_dim)

    w1, b1, w2, b2, w3, b3 = params
    hp = jax.lax.Precision.HIGHEST

    # (a) Loose sanity check against the pure-f32 module semantics (kernel uses bf16 MXU inputs).
    ref = jnp.maximum(jnp.dot(x, w1, precision=hp) + b1, 0.0)
    ref = jnp.maximum(jnp.dot(ref, w2, precision=hp) + b2, 0.0)
    ref = jnp.dot(ref, w3, precision=hp) + b3
    assert jnp.allclose(out, ref, atol=5e-2, rtol=5e-2), float(jnp.max(jnp.abs(out - ref)))

    # (b) Tight check against an emulation of the kernel's bf16-input / f32-acc math.
    def q(a):
        return a.astype(jnp.bfloat16).astype(jnp.float32)

    h1 = jnp.maximum(jnp.dot(q(x), q(w1), precision=hp) + b1, 0.0)
    h2 = jnp.maximum(jnp.dot(q(h1), q(w2), precision=hp) + b2, 0.0)
    ref_q = jnp.dot(q(h2), q(w3), precision=hp) + b3
    assert jnp.allclose(out, ref_q, atol=1e-2, rtol=1e-2), float(jnp.max(jnp.abs(out - ref_q)))

    # Multi-tile grid path: 1024 rows -> two 512-row tiles (even grid for v7x megacore).
    x_big = jax.random.uniform(jax.random.PRNGKey(1), (1024, input_dim), jnp.float32)
    out_big = jax.block_until_ready(jax.jit(prompt_adjustment_forward)(x_big, params))
    assert out_big.shape == (1024, output_dim)
    hb1 = jnp.maximum(jnp.dot(q(x_big), q(w1), precision=hp) + b1, 0.0)
    hb2 = jnp.maximum(jnp.dot(q(hb1), q(w2), precision=hp) + b2, 0.0)
    ref_big = jnp.dot(q(hb2), q(w3), precision=hp) + b3
    assert jnp.allclose(out_big, ref_big, atol=1e-2, rtol=1e-2)

    print("KERNEL_OK")
</pallas_src>

<mosaic_0001>
module attributes {stable_mosaic.version = 11 : i64} {
  func.func @_mlp_kernel(%arg0: i32, %arg1: memref<128x8xf32, #tpu.memory_space<vmem>>, %arg2: memref<144x128xbf16, #tpu.memory_space<vmem>>, %arg3: memref<2x128xf32, #tpu.memory_space<vmem>>, %arg4: memref<8x1xf32, #tpu.memory_space<vmem>>, %arg5: memref<8x128xf32, #tpu.memory_space<vmem>>) attributes {dimension_semantics = [#tpu.dimension_semantics<parallel>], iteration_bounds = array<i64: 1>, scalar_prefetch = 0 : i64, scratch_operands = 0 : i64, tpu.core_type = #tpu.core_type<tc>, window_params = [{transform_indices = @transform_0, window_bounds = array<i64: 128, 8>}, {pipeline_mode = #tpu.pipeline_mode<synchronous>, transform_indices = @transform_1, window_bounds = array<i64: 144, 128>}, {pipeline_mode = #tpu.pipeline_mode<synchronous>, transform_indices = @transform_2, window_bounds = array<i64: 2, 128>}, {pipeline_mode = #tpu.pipeline_mode<synchronous>, transform_indices = @transform_3, window_bounds = array<i64: 8, 1>}, {transform_indices = @transform_4, window_bounds = array<i64: 8, 128>}]} {
    %c0 = arith.constant 0 : index
    %c0_0 = arith.constant 0 : index
    %0 = vector.load %arg1[%c0, %c0_0] : memref<128x8xf32, #tpu.memory_space<vmem>>, vector<128x8xf32>
    %1 = arith.truncf %0 : vector<128x8xf32> to vector<128x8xbf16>
    %c0_1 = arith.constant 0 : index
    %c0_2 = arith.constant 0 : index
    %2 = vector.load %arg2[%c0_1, %c0_2] : memref<144x128xbf16, #tpu.memory_space<vmem>>, vector<8x128xbf16>
    %cst = arith.constant dense<0.000000e+00> : vector<128x128xf32>
    %3 = tpu.matmul %1, %2, %cst {dimension_numbers = #tpu.dot_dimension_numbers<[1], [0], [0], [1], [0, 0, 1, 1], [], []>} : vector<128x8xbf16>, vector<8x128xbf16>, vector<128x128xf32> -> vector<128x128xf32>
    %c0_3 = arith.constant 0 : index
    %c0_4 = arith.constant 0 : index
    %4 = vector.load %arg3[%c0_3, %c0_4] : memref<2x128xf32, #tpu.memory_space<vmem>>, vector<1x128xf32>
    %5 = vector.broadcast %4 : vector<1x128xf32> to vector<128x128xf32>
    %6 = arith.addf %3, %5 : vector<128x128xf32>
    %cst_5 = arith.constant 0.000000e+00 : f32
    %7 = vector.broadcast %cst_5 : f32 to vector<128x128xf32>
    %8 = arith.maximumf %6, %7 : vector<128x128xf32>
    %9 = arith.truncf %8 : vector<128x128xf32> to vector<128x128xbf16>
    %c8 = arith.constant 8 : index
    %c0_6 = arith.constant 0 : index
    %10 = vector.load %arg2[%c8, %c0_6] : memref<144x128xbf16, #tpu.memory_space<vmem>>, vector<128x128xbf16>
    %cst_7 = arith.constant dense<0.000000e+00> : vector<128x128xf32>
    %11 = tpu.matmul %9, %10, %cst_7 {dimension_numbers = #tpu.dot_dimension_numbers<[1], [0], [0], [1], [0, 0, 1, 1], [], []>} : vector<128x128xbf16>, vector<128x128xbf16>, vector<128x128xf32> -> vector<128x128xf32>
    %c1 = arith.constant 1 : index
    %c0_8 = arith.constant 0 : index
    %12 = vector.load %arg3[%c1, %c0_8] : memref<2x128xf32, #tpu.memory_space<vmem>>, vector<1x128xf32>
    %13 = vector.broadcast %12 : vector<1x128xf32> to vector<128x128xf32>
    %14 = arith.addf %11, %13 : vector<128x128xf32>
    %cst_9 = arith.constant 0.000000e+00 : f32
    %15 = vector.broadcast %cst_9 : f32 to vector<128x128xf32>
    %16 = arith.maximumf %14, %15 : vector<128x128xf32>
    %17 = arith.truncf %16 : vector<128x128xf32> to vector<128x128xbf16>
    %c136 = arith.constant 136 : index
    %c0_10 = arith.constant 0 : index
    %18 = vector.load %arg2[%c136, %c0_10] : memref<144x128xbf16, #tpu.memory_space<vmem>>, vector<8x128xbf16>
    %cst_11 = arith.constant dense<0.000000e+00> : vector<8x128xf32>
    %19 = tpu.matmul %18, %17, %cst_11 {dimension_numbers = #tpu.dot_dimension_numbers<[1], [1], [0], [0], [0, 0, 1, 0], [], []>} : vector<8x128xbf16>, vector<128x128xbf16>, vector<8x128xf32> -> vector<8x128xf32>
    %c0_12 = arith.constant 0 : index
    %c0_13 = arith.constant 0 : index
    %20 = vector.load %arg4[%c0_12, %c0_13] : memref<8x1xf32, #tpu.memory_space<vmem>>, vector<8x1xf32>
    %21 = vector.broadcast %20 : vector<8x1xf32> to vector<8x128xf32>
    %22 = arith.addf %19, %21 : vector<8x128xf32>
    %c0_14 = arith.constant 0 : index
    %c0_15 = arith.constant 0 : index
    %23 = vector.load %arg5[%c0_14, %c0_15] : memref<8x128xf32, #tpu.memory_space<vmem>>, vector<8x128xf32>
    tpu.vector_store %arg5[%c0_14, %c0_15], %22 {strides = array<i32>} : memref<8x128xf32, #tpu.memory_space<vmem>>, vector<8x128xf32>,
    return
  }
  func.func @transform_0(%arg0: i32) -> (i32, i32) {
    %c0_i32 = arith.constant 0 : i32
    %c0_i32_0 = arith.constant 0 : i32
    return %arg0, %c0_i32 : i32, i32
  }
  func.func @transform_1(%arg0: i32) -> (i32, i32) {
    %c0_i32 = arith.constant 0 : i32
    %c0_i32_0 = arith.constant 0 : i32
    %c0_i32_1 = arith.constant 0 : i32
    return %c0_i32, %c0_i32_0 : i32, i32
  }
  func.func @transform_2(%arg0: i32) -> (i32, i32) {
    %c0_i32 = arith.constant 0 : i32
    %c0_i32_0 = arith.constant 0 : i32
    %c0_i32_1 = arith.constant 0 : i32
    return %c0_i32, %c0_i32_0 : i32, i32
  }
  func.func @transform_3(%arg0: i32) -> (i32, i32) {
    %c0_i32 = arith.constant 0 : i32
    %c0_i32_0 = arith.constant 0 : i32
    %c0_i32_1 = arith.constant 0 : i32
    return %c0_i32, %c0_i32_0 : i32, i32
  }
  func.func @transform_4(%arg0: i32) -> (i32, i32) {
    %c0_i32 = arith.constant 0 : i32
    %c0_i32_0 = arith.constant 0 : i32
    return %c0_i32, %arg0 : i32, i32
  }
}

</mosaic_0001>

<llo_original>
// kernel: prompt_adjustment_forward_pallas.1
$region0: #{prompt_adjustment_forward_pallas.1}
  #allocation0 [shape = 'u32[]', space=smem, size = 0x4, offset = 0x4, fixed_abs, tag = 'smem constant byte address 0x4 - core index']
  #allocation1 [shape = 'u32[144,128]{1,0:T(1,128)}', space=vmem, size = 0x12000, scoped, tag = 'internal scratch']
  %s0 = inlined_call_operand.vmem [shape: f32[128,8], index: 0, kind: input, shape index: {}]
  %s1 = inlined_call_operand.vmem [shape: bf16[144,128], index: 1, kind: input, shape index: {}]
  %s2 = inlined_call_operand.vmem [shape: f32[2,128], index: 2, kind: input, shape index: {}]
  %s3 = inlined_call_operand.vmem [shape: f32[8,1], index: 3, kind: input, shape index: {}]
  %s4 = inlined_call_operand.vmem [shape: f32[8,128], index: 4, kind: output, shape index: {}]
  %s5 = sld [smem:[#allocation0]]
  $region26: #{prompt_adjustment_forward_pallas.1} parent=0
    _
  %s7 = ssub.s32 1, %s5
  %s8 = scalar_select 0, %s7, %s5
  // Predicated region
  $region2: #{prompt_adjustment_forward_pallas.1} parent=0 // pred_check
    _
  $region3: #{prompt_adjustment_forward_pallas.1} parent=0 // pred_check_branch
    %10 = sbr.rel (0) target = $region5
  $region4: #{prompt_adjustment_forward_pallas.1} parent=0 // pred_region
    _
  $region5: #{prompt_adjustment_forward_pallas.1} parent=0 // pred_fallthru
    _
  // Predicated region
  $region6: #{prompt_adjustment_forward_pallas.1} parent=0 // pred_check
    _
  $region7: #{prompt_adjustment_forward_pallas.1} parent=0 // pred_check_branch
    %12 = sbr.rel (0) target = $region9
  $region8: #{prompt_adjustment_forward_pallas.1} parent=0 // pred_region
    _
  $region9: #{prompt_adjustment_forward_pallas.1} parent=0 // pred_fallthru
    _
  // Predicated region
  $region10: #{prompt_adjustment_forward_pallas.1} parent=0 // pred_check
    _
  $region11: #{prompt_adjustment_forward_pallas.1} parent=0 // pred_check_branch
    %14 = sbr.rel (0) target = $region13
  $region12: #{prompt_adjustment_forward_pallas.1} parent=0 // pred_region
    _
  $region13: #{prompt_adjustment_forward_pallas.1} parent=0 // pred_fallthru
    _
  // Predicated region
  $region14: #{prompt_adjustment_forward_pallas.1} parent=0 // pred_check
    _
  $region15: #{prompt_adjustment_forward_pallas.1} parent=0 // pred_check_branch
    %16 = sbr.rel (0) target = $region17
  $region16: #{prompt_adjustment_forward_pallas.1} parent=0 // pred_region
    _
  $region17: #{prompt_adjustment_forward_pallas.1} parent=0 // pred_fallthru
    _
  %v18 = vld [vmem:[%s0] sm:$0xff]
  %v19 = vld [vmem:[%s0 + $0x8] sm:$0xff]
  %v20 = vld [vmem:[%s0 + $0x10] sm:$0xff]
  %v21 = vld [vmem:[%s0 + $0x18] sm:$0xff]
  %v22 = vld [vmem:[%s0 + $0x20] sm:$0xff]
  %v23 = vld [vmem:[%s0 + $0x28] sm:$0xff]
  %v24 = vld [vmem:[%s0 + $0x30] sm:$0xff]
  %v25 = vld [vmem:[%s0 + $0x38] sm:$0xff]
  %v26 = vld [vmem:[%s0 + $0x40] sm:$0xff]
  %v27 = vld [vmem:[%s0 + $0x48] sm:$0xff]
  %v28 = vld [vmem:[%s0 + $0x50] sm:$0xff]
  %v29 = vld [vmem:[%s0 + $0x58] sm:$0xff]
  %v30 = vld [vmem:[%s0 + $0x60] sm:$0xff]
  %v31 = vld [vmem:[%s0 + $0x68] sm:$0xff]
  %v32 = vld [vmem:[%s0 + $0x70] sm:$0xff]
  %v33 = vld [vmem:[%s0 + $0x78] sm:$0xff]
  %v34 = vpack.c.bf16 %v19, %v18
  %v35 = vpack.c.bf16 %v21, %v20
  %v36 = vpack.c.bf16 %v23, %v22
  %v37 = vpack.c.bf16 %v25, %v24
  %v38 = vpack.c.bf16 %v27, %v26
  %v39 = vpack.c.bf16 %v29, %v28
  %v40 = vpack.c.bf16 %v31, %v30
  %v41 = vpack.c.bf16 %v33, %v32
  %v42 = vld [vmem:[%s1] sm:$0xf]
  %v43 = vld [vmem:[%s2] sm:$0x1]
  %v44 = vlaneseq
  %v45 = vshrl.u32 %v44, 7
  %v46 = vsub.s32 0, %v45
  %v47 = vrot.slane %v43, %v46
  %vm48 = vcmask 64512
  %v50 = vsel %vm48, %v34, 0
  %v53 = vsel %vm48, %v35, 0
  %v56 = vsel %vm48, %v36, 0
  %v59 = vsel %vm48, %v37, 0
  %v62 = vsel %vm48, %v38, 0
  %v65 = vsel %vm48, %v39, 0
  %v68 = vsel %vm48, %v40, 0
  %v71 = vsel %vm48, %v41, 0
  %vm73 = vcmask 1043456
  %v75 = vsel %vm73, %v42, 0
  %77 = vmatprep.subr.bf16.mxu0 0
  %78 = vmatpush1.bf16.msra.mxu0 %v75
  %79 = vmatprep.subr.bf16.mxu0 0
  %80 = vmatpush1.bf16.msra.mxu0 0
  %81 = vmatprep.subr.bf16.mxu0 0
  %82 = vmatpush1.bf16.msra.mxu0 0
  %83 = vmatprep.subr.bf16.mxu0 0
  %84 = vmatpush1.bf16.msra.mxu0 0
  %85 = vmatprep.subr.bf16.mxu0 0
  %86 = vmatpush1.bf16.msra.mxu0 0
  %87 = vmatprep.subr.bf16.mxu0 0
  %88 = vmatpush1.bf16.msra.mxu0 0
  %89 = vmatprep.subr.bf16.mxu0 0
  %90 = vmatpush1.bf16.msra.mxu0 0
  %91 = vmatprep.subr.bf16.mxu0 0
  %92 = vmatpush1.bf16.msra.mxu0 0
  %93 = vmatprep.subr.bf16.mxu0 0
  %94 = vmatpush1.bf16.msra.mxu0 0
  %95 = vmatprep.subr.bf16.mxu0 0
  %96 = vmatpush1.bf16.msra.mxu0 0
  %97 = vmatprep.subr.bf16.mxu0 0
  %98 = vmatpush1.bf16.msra.mxu0 0
  %99 = vmatprep.subr.bf16.mxu0 0
  %100 = vmatpush1.bf16.msra.mxu0 0
  %101 = vmatprep.subr.bf16.mxu0 0
  %102 = vmatpush1.bf16.msra.mxu0 0
  %103 = vmatprep.subr.bf16.mxu0 0
  %104 = vmatpush1.bf16.msra.mxu0 0
  %105 = vmatprep.subr.bf16.mxu0 0
  %106 = vmatpush1.bf16.msra.mxu0 0
  %107 = vmatprep.subr.bf16.mxu0 0
  %108 = vmatpush1.bf16.msra.mxu0 0
  %109 = vmatprep.mubr.bf16.mxu0 0
  %110 = vmatmul.mubr.bf16.gmra.mrb[0].mxu0 %v50
  %v111 = vpop.f32.mrb[0].mxu0
  %v112 = vadd.f32 %v47, %v111
  %v113 = vpop.f32.mrb[0].mxu0
  %v114 = vpop.f32.mrb[0].mxu0
  %v115 = vadd.f32 %v47, %v114
  %v116 = vpop.f32.mrb[0].mxu0
  %117 = vmatprep.mubr.bf16.mxu0 0
  %118 = vmatmul.mubr.bf16.gmra.mrb[0].mxu0 %v53
  %v119 = vpop.f32.mrb[0].mxu0
  %v120 = vadd.f32 %v47, %v119
  %v121 = vpop.f32.mrb[0].mxu0
  %v122 = vpop.f32.mrb[0].mxu0
  %v123 = vadd.f32 %v47, %v122
  %v124 = vpop.f32.mrb[0].mxu0
  %125 = vmatprep.mubr.bf16.mxu0 0
  %126 = vmatmul.mubr.bf16.gmra.mrb[0].mxu0 %v56
  %v127 = vpop.f32.mrb[0].mxu0
  %v128 = vadd.f32 %v47, %v127
  %v129 = vpop.f32.mrb[0].mxu0
  %v130 = vpop.f32.mrb[0].mxu0
  %v131 = vadd.f32 %v47, %v130
  %v132 = vpop.f32.mrb[0].mxu0
  %133 = vmatprep.mubr.bf16.mxu0 0
  %134 = vmatmul.mubr.bf16.gmra.mrb[0].mxu0 %v59
  %v135 = vpop.f32.mrb[0].mxu0
  %v136 = vadd.f32 %v47, %v135
  %v137 = vpop.f32.mrb[0].mxu0
  %v138 = vpop.f32.mrb[0].mxu0
  %v139 = vadd.f32 %v47, %v138
  %v140 = vpop.f32.mrb[0].mxu0
  %141 = vmatprep.mubr.bf16.mxu0 0
  %142 = vmatmul.mubr.bf16.gmra.mrb[0].mxu0 %v62
  %v143 = vpop.f32.mrb[0].mxu0
  %v144 = vadd.f32 %v47, %v143
  %v145 = vpop.f32.mrb[0].mxu0
  %v146 = vpop.f32.mrb[0].mxu0
  %v147 = vadd.f32 %v47, %v146
  %v148 = vpop.f32.mrb[0].mxu0
  %149 = vmatprep.mubr.bf16.mxu0 0
  %150 = vmatmul.mubr.bf16.gmra.mrb[0].mxu0 %v65
  %v151 = vpop.f32.mrb[0].mxu0
  %v152 = vadd.f32 %v47, %v151
  %v153 = vpop.f32.mrb[0].mxu0
  %v154 = vpop.f32.mrb[0].mxu0
  %v155 = vadd.f32 %v47, %v154
  %v156 = vpop.f32.mrb[0].mxu0
  %157 = vmatprep.mubr.bf16.mxu0 0
  %158 = vmatmul.mubr.bf16.gmra.mrb[0].mxu0 %v68
  %v159 = vpop.f32.mrb[0].mxu0
  %v160 = vadd.f32 %v47, %v159
  %v161 = vpop.f32.mrb[0].mxu0
  %v162 = vpop.f32.mrb[0].mxu0
  %v163 = vadd.f32 %v47, %v162
  %v164 = vpop.f32.mrb[0].mxu0
  %165 = vmatprep.mubr.bf16.mxu0 0
  %166 = vmatmul.mubr.bf16.gmra.mrb[0].mxu0 %v71
  %v167 = vpop.f32.mrb[0].mxu0
  %v168 = vadd.f32 %v47, %v167
  %v169 = vpop.f32.mrb[0].mxu0
  %v170 = vpop.f32.mrb[0].mxu0
  %v171 = vadd.f32 %v47, %v170
  %v172 = vpop.f32.mrb[0].mxu0
  %173 = vdwg.mxu0
  %v174 = vmax.f32 %v112, 0.0
  %v175 = vmax.f32 %v115, 0.0
  %v176 = vmax.f32 %v120, 0.0
  %v177 = vmax.f32 %v123, 0.0
  %v178 = vmax.f32 %v128, 0.0
  %v179 = vmax.f32 %v131, 0.0
  %v180 = vmax.f32 %v136, 0.0
  %v181 = vmax.f32 %v139, 0.0
  %v182 = vmax.f32 %v144, 0.0
  %v183 = vmax.f32 %v147, 0.0
  %v184 = vmax.f32 %v152, 0.0
  %v185 = vmax.f32 %v155, 0.0
  %v186 = vmax.f32 %v160, 0.0
  %v187 = vmax.f32 %v163, 0.0
  %v188 = vmax.f32 %v168, 0.0
  %v189 = vmax.f32 %v171, 0.0
  %v190 = vpack.c.bf16 %v175, %v174
  %v191 = vpack.c.bf16 %v177, %v176
  %v192 = vpack.c.bf16 %v179, %v178
  %v193 = vpack.c.bf16 %v181, %v180
  %v194 = vpack.c.bf16 %v183, %v182
  %v195 = vpack.c.bf16 %v185, %v184
  %v196 = vpack.c.bf16 %v187, %v186
  %v197 = vpack.c.bf16 %v189, %v188
  %v198 = vld [vmem:[%s1 + $0x4] sm:$0xf]
  %v199 = vld [vmem:[%s1 + $0x8] sm:$0xf]
  %v200 = vld [vmem:[%s1 + $0xc] sm:$0xf]
  %v201 = vld [vmem:[%s1 + $0x10] sm:$0xf]
  %v202 = vld [vmem:[%s1 + $0x14] sm:$0xf]
  %v203 = vld [vmem:[%s1 + $0x18] sm:$0xf]
  %v204 = vld [vmem:[%s1 + $0x1c] sm:$0xf]
  %v205 = vld [vmem:[%s1 + $0x20] sm:$0xf]
  %v206 = vld [vmem:[%s1 + $0x24] sm:$0xf]
  %v207 = vld [vmem:[%s1 + $0x28] sm:$0xf]
  %v208 = vld [vmem:[%s1 + $0x2c] sm:$0xf]
  %v209 = vld [vmem:[%s1 + $0x30] sm:$0xf]
  %v210 = vld [vmem:[%s1 + $0x34] sm:$0xf]
  %v211 = vld [vmem:[%s1 + $0x38] sm:$0xf]
  %v212 = vld [vmem:[%s1 + $0x3c] sm:$0xf]
  %v213 = vld [vmem:[%s1 + $0x40] sm:$0xf]
  %v214 = vld [vmem:[%s2 + $0x1] sm:$0x1]
  %v215 = vlaneseq
  %v216 = vshrl.u32 %v215, 7
  %v217 = vsub.s32 0, %v216
  %v218 = vrot.slane %v214, %v217
  %v235 = vunpack.c.l.b16 %v198
  %v236 = vunpack.c.l.b16 %v199
  %v237 = vunpack.c.l.b16 %v200
  %v238 = vunpack.c.l.b16 %v201
  %v239 = vunpack.c.l.b16 %v202
  %v240 = vunpack.c.l.b16 %v203
  %v241 = vunpack.c.l.b16 %v204
  %v242 = vunpack.c.l.b16 %v205
  %v243 = vunpack.c.l.b16 %v206
  %v244 = vunpack.c.l.b16 %v207
  %v245 = vunpack.c.l.b16 %v208
  %v246 = vunpack.c.l.b16 %v209
  %v247 = vunpack.c.l.b16 %v210
  %v248 = vunpack.c.l.b16 %v211
  %v249 = vunpack.c.l.b16 %v212
  %v250 = vunpack.c.l.b16 %v213
  %v251 = vpack.c.b16 %v236, %v235
  %v252 = vpack.c.b16 %v238, %v237
  %v253 = vpack.c.b16 %v240, %v239
  %v254 = vpack.c.b16 %v242, %v241
  %v255 = vpack.c.b16 %v244, %v243
  %v256 = vpack.c.b16 %v246, %v245
  %v257 = vpack.c.b16 %v248, %v247
  %v258 = vpack.c.b16 %v250, %v249
  %267 = vmatprep.subr.bf16.mxu0 0
  %268 = vmatpush1.bf16.msra.mxu0 %v251
  %269 = vmatprep.subr.bf16.mxu0 0
  %270 = vmatpush1.bf16.msra.mxu0 %v252
  %271 = vmatprep.subr.bf16.mxu0 0
  %272 = vmatpush1.bf16.msra.mxu0 %v253
  %273 = vmatprep.subr.bf16.mxu0 0
  %274 = vmatpush1.bf16.msra.mxu0 %v254
  %275 = vmatprep.subr.bf16.mxu0 0
  %276 = vmatpush1.bf16.msra.mxu0 %v255
  %277 = vmatprep.subr.bf16.mxu0 0
  %278 = vmatpush1.bf16.msra.mxu0 %v256
  %279 = vmatprep.subr.bf16.mxu0 0
  %280 = vmatpush1.bf16.msra.mxu0 %v257
  %281 = vmatprep.subr.bf16.mxu0 0
  %282 = vmatpush1.bf16.msra.mxu0 %v258
  %283 = vmatprep.subr.bf16.mxu0 0
  %284 = vmatpush1.bf16.msra.mxu0 0
  %285 = vmatprep.subr.bf16.mxu0 0
  %286 = vmatpush1.bf16.msra.mxu0 0
  %287 = vmatprep.subr.bf16.mxu0 0
  %288 = vmatpush1.bf16.msra.mxu0 0
  %289 = vmatprep.subr.bf16.mxu0 0
  %290 = vmatpush1.bf16.msra.mxu0 0
  %291 = vmatprep.subr.bf16.mxu0 0
  %292 = vmatpush1.bf16.msra.mxu0 0
  %293 = vmatprep.subr.bf16.mxu0 0
  %294 = vmatpush1.bf16.msra.mxu0 0
  %295 = vmatprep.subr.bf16.mxu0 0
  %296 = vmatpush1.bf16.msra.mxu0 0
  %297 = vmatprep.subr.bf16.mxu0 0
  %298 = vmatpush1.bf16.msra.mxu0 0
  %299 = vmatprep.mubr.bf16.mxu0 0
  %300 = vmatmul.mubr.bf16.gmra.mrb[0].mxu0 %v190
  %v301 = vpop.f32.mrb[0].mxu0
  %v302 = vadd.f32 %v218, %v301
  %v303 = vpop.f32.mrb[0].mxu0
  %v304 = vpop.f32.mrb[0].mxu0
  %v305 = vadd.f32 %v218, %v304
  %v306 = vpop.f32.mrb[0].mxu0
  %307 = vmatprep.mubr.bf16.mxu0 0
  %308 = vmatmul.mubr.bf16.gmra.mrb[0].mxu0 %v191
  %v309 = vpop.f32.mrb[0].mxu0
  %v310 = vadd.f32 %v218, %v309
  %v311 = vpop.f32.mrb[0].mxu0
  %v312 = vpop.f32.mrb[0].mxu0
  %v313 = vadd.f32 %v218, %v312
  %v314 = vpop.f32.mrb[0].mxu0
  %315 = vmatprep.mubr.bf16.mxu0 0
  %316 = vmatmul.mubr.bf16.gmra.mrb[0].mxu0 %v192
  %v317 = vpop.f32.mrb[0].mxu0
  %v318 = vadd.f32 %v218, %v317
  %v319 = vpop.f32.mrb[0].mxu0
  %v320 = vpop.f32.mrb[0].mxu0
  %v321 = vadd.f32 %v218, %v320
  %v322 = vpop.f32.mrb[0].mxu0
  %323 = vmatprep.mubr.bf16.mxu0 0
  %324 = vmatmul.mubr.bf16.gmra.mrb[0].mxu0 %v193
  %v325 = vpop.f32.mrb[0].mxu0
  %v326 = vadd.f32 %v218, %v325
  %v327 = vpop.f32.mrb[0].mxu0
  %v328 = vpop.f32.mrb[0].mxu0
  %v329 = vadd.f32 %v218, %v328
  %v330 = vpop.f32.mrb[0].mxu0
  %331 = vmatprep.mubr.bf16.mxu0 0
  %332 = vmatmul.mubr.bf16.gmra.mrb[0].mxu0 %v194
  %v333 = vpop.f32.mrb[0].mxu0
  %v334 = vadd.f32 %v218, %v333
  %v335 = vpop.f32.mrb[0].mxu0
  %v336 = vpop.f32.mrb[0].mxu0
  %v337 = vadd.f32 %v218, %v336
  %v338 = vpop.f32.mrb[0].mxu0
  %339 = vmatprep.mubr.bf16.mxu0 0
  %340 = vmatmul.mubr.bf16.gmra.mrb[0].mxu0 %v195
  %v341 = vpop.f32.mrb[0].mxu0
  %v342 = vadd.f32 %v218, %v341
  %v343 = vpop.f32.mrb[0].mxu0
  %v344 = vpop.f32.mrb[0].mxu0
  %v345 = vadd.f32 %v218, %v344
  %v346 = vpop.f32.mrb[0].mxu0
  %347 = vmatprep.mubr.bf16.mxu0 0
  %348 = vmatmul.mubr.bf16.gmra.mrb[0].mxu0 %v196
  %v349 = vpop.f32.mrb[0].mxu0
  %v350 = vadd.f32 %v218, %v349
  %v351 = vpop.f32.mrb[0].mxu0
  %v352 = vpop.f32.mrb[0].mxu0
  %v353 = vadd.f32 %v218, %v352
  %v354 = vpop.f32.mrb[0].mxu0
  %355 = vmatprep.mubr.bf16.mxu0 0
  %356 = vmatmul.mubr.bf16.gmra.mrb[0].mxu0 %v197
  %v357 = vpop.f32.mrb[0].mxu0
  %v358 = vadd.f32 %v218, %v357
  %v359 = vpop.f32.mrb[0].mxu0
  %v360 = vpop.f32.mrb[0].mxu0
  %v361 = vadd.f32 %v218, %v360
  %v362 = vpop.f32.mrb[0].mxu0
  %363 = vdwg.mxu0
  %v364 = vmax.f32 %v302, 0.0
  %v365 = vmax.f32 %v305, 0.0
  %v366 = vmax.f32 %v310, 0.0
  %v367 = vmax.f32 %v313, 0.0
  %v368 = vmax.f32 %v318, 0.0
  %v369 = vmax.f32 %v321, 0.0
  %v370 = vmax.f32 %v326, 0.0
  %v371 = vmax.f32 %v329, 0.0
  %v372 = vmax.f32 %v334, 0.0
  %v373 = vmax.f32 %v337, 0.0
  %v374 = vmax.f32 %v342, 0.0
  %v375 = vmax.f32 %v345, 0.0
  %v376 = vmax.f32 %v350, 0.0
  %v377 = vmax.f32 %v353, 0.0
  %v378 = vmax.f32 %v358, 0.0
  %v379 = vmax.f32 %v361, 0.0
  %v380 = vpack.c.bf16 %v365, %v364
  %v381 = vpack.c.bf16 %v367, %v366
  %v382 = vpack.c.bf16 %v369, %v368
  %v383 = vpack.c.bf16 %v371, %v370
  %v384 = vpack.c.bf16 %v373, %v372
  %v385 = vpack.c.bf16 %v375, %v374
  %v386 = vpack.c.bf16 %v377, %v376
  %v387 = vpack.c.bf16 %v379, %v378
  %v388 = vld [vmem:[%s1 + $0x44] sm:$0xf]
  %v389 = vld [vmem:[%s3] sm:$0xff]
  %391 = vset.pattern.permute.xlu0 0
  %392 = vperm.xlu0 %391, %v389
  %v393 = vpop.permute.xlu0 %392
  %395 = vmatprep.subr.bf16.mxu0 0
  %396 = vmatpush1.bf16.xpose.msra.mxu0 %v380
  %397 = vmatprep.subr.bf16.mxu0 0
  %398 = vmatpush1.bf16.xpose.msra.mxu0 %v381
  %399 = vmatprep.subr.bf16.mxu0 0
  %400 = vmatpush1.bf16.xpose.msra.mxu0 %v382
  %401 = vmatprep.subr.bf16.mxu0 0
  %402 = vmatpush1.bf16.xpose.msra.mxu0 %v383
  %403 = vmatprep.subr.bf16.mxu0 0
  %404 = vmatpush1.bf16.xpose.msra.mxu0 %v384
  %405 = vmatprep.subr.bf16.mxu0 0
  %406 = vmatpush1.bf16.xpose.msra.mxu0 %v385
  %407 = vmatprep.subr.bf16.mxu0 0
  %408 = vmatpush1.bf16.xpose.msra.mxu0 %v386
  %409 = vmatprep.subr.bf16.mxu0 0
  %410 = vmatpush1.bf16.xpose.msra.mxu0 %v387
  %411 = vmatprep.subr.bf16.mxu0 0
  %412 = vmatpush1.bf16.xpose.msra.mxu0 0
  %413 = vmatprep.subr.bf16.mxu0 0
  %414 = vmatpush1.bf16.xpose.msra.mxu0 0
  %415 = vmatprep.subr.bf16.mxu0 0
  %416 = vmatpush1.bf16.xpose.msra.mxu0 0
  %417 = vmatprep.subr.bf16.mxu0 0
  %418 = vmatpush1.bf16.xpose.msra.mxu0 0
  %419 = vmatprep.subr.bf16.mxu0 0
  %420 = vmatpush1.bf16.xpose.msra.mxu0 0
  %421 = vmatprep.subr.bf16.mxu0 0
  %422 = vmatpush1.bf16.xpose.msra.mxu0 0
  %423 = vmatprep.subr.bf16.mxu0 0
  %424 = vmatpush1.bf16.xpose.msra.mxu0 0
  %425 = vmatprep.subr.bf16.mxu0 0
  %426 = vmatpush1.bf16.xpose.msra.mxu0 0
  %427 = vmatprep.mubr.bf16.mxu0 0
  %428 = vmatmul.mubr.bf16.gmra.mrb[0].mxu0 %v388
  %v429 = vpop.f32.mrb[0].mxu0
  %v430 = vadd.f32 %v393, %v429
  %v431 = vpop.f32.mrb[0].mxu0
  %v432 = vpop.f32.mrb[0].mxu0
  %v433 = vpop.f32.mrb[0].mxu0
  %434 = vdwg.mxu0
  %435 = vst [vmem:[%s4] sm:$0xff] %v430
  // Predicated region
  $region18: #{prompt_adjustment_forward_pallas.1} parent=0 // pred_check
    _
  $region19: #{prompt_adjustment_forward_pallas.1} parent=0 // pred_check_branch
    %437 = sbr.rel (0) target = $region21
  $region20: #{prompt_adjustment_forward_pallas.1} parent=0 // pred_region
    _
  $region21: #{prompt_adjustment_forward_pallas.1} parent=0 // pred_fallthru
    _
  // Predicated region
  $region22: #{prompt_adjustment_forward_pallas.1} parent=0 // pred_check
    _
  $region23: #{prompt_adjustment_forward_pallas.1} parent=0 // pred_check_branch
    %439 = sbr.rel (0) target = $region25
  $region24: #{prompt_adjustment_forward_pallas.1} parent=0 // pred_region
    _
  $region25: #{prompt_adjustment_forward_pallas.1} parent=0 // pred_fallthru
    _

</llo_original>
